<compile_context>
chip_gen: v5e
topology: v5e:2x2
jax: 0.10.0
libtpu: 0.0.40
codegen_flags: <defaults>
</compile_context>

<pallas_src>
import functools

import jax
import jax.numpy as jnp
from jax.experimental import pallas as pl
from jax.experimental.pallas import tpu as pltpu


def _bicubic_weight_matrix(in_size: int, out_size: int):
    """(out_size, in_size) f32 bicubic interpolation matrix (a=-0.75, half-pixel)."""
    A = -0.75
    scale = in_size / out_size
    i = jnp.arange(out_size, dtype=jnp.float32)
    x = (i + 0.5) * scale - 0.5
    x0 = jnp.floor(x)
    t = x - x0

    def cub1(s):  # |s| <= 1
        return ((A + 2.0) * s - (A + 3.0)) * s * s + 1.0

    def cub2(s):  # 1 < |s| < 2
        return ((A * s - 5.0 * A) * s + 8.0 * A) * s - 4.0 * A

    w = jnp.stack([cub2(t + 1.0), cub1(t), cub1(1.0 - t), cub2(2.0 - t)], axis=1)  # (out, 4)
    idx = x0[:, None].astype(jnp.int32) + jnp.arange(-1, 3, dtype=jnp.int32)[None, :]
    idx = jnp.clip(idx, 0, in_size - 1)                        # replicate edges
    onehot = jax.nn.one_hot(idx, in_size, dtype=jnp.float32)   # (out, 4, in)
    return jnp.sum(w[:, :, None] * onehot, axis=1)             # (out, in) f32


def _resize_pad_kernel(x_ref, whp_ref, wwtp_ref, o_ref, *, h_first, compute_dtype,
                       add_fill, fill, pad_top, pad_left, new_h, new_w, S):
    # x_ref    : (1, H, W) native dtype (cast to compute_dtype in VMEM below)
    # whp_ref  : (S, H)    row-interp matrix with zero rows in the pad band
    # wwtp_ref : (W, S)    col-interp matrix (transposed) with zero pad columns
    # o_ref    : (1, S, S) output canvas for this channel
    x = x_ref[0].astype(compute_dtype)          # in-VMEM cast (no wrapper cast pass)
    wh = whp_ref[...]                            # (S, H)
    wwt = wwtp_ref[...]                          # (W, S)
    if h_first:   # portrait (H >= W): contract the larger dim H first
        t = jnp.dot(wh, x, preferred_element_type=jnp.float32)         # (S, W) f32
        res = jnp.dot(t.astype(compute_dtype), wwt,
                      preferred_element_type=jnp.float32)               # (S, S) f32
    else:         # landscape: contract W first
        t = jnp.dot(x, wwt, preferred_element_type=jnp.float32)         # (H, S) f32
        res = jnp.dot(wh, t.astype(compute_dtype),
                      preferred_element_type=jnp.float32)               # (S, S) f32
    if add_fill:
        rows = jax.lax.broadcasted_iota(jnp.int32, (S, S), 0)
        cols = jax.lax.broadcasted_iota(jnp.int32, (S, S), 1)
        outside = ((rows < pad_top) | (rows >= pad_top + new_h)
                   | (cols < pad_left) | (cols >= pad_left + new_w))
        res = jnp.where(outside, jnp.float32(fill), res)                 # VPU, no DMA
    o_ref[0] = res.astype(o_ref.dtype)


def _vmem_limit_bytes(per_step_bytes: int) -> int:
    try:
        cap = int(getattr(pltpu.get_tpu_info(), "vmem_capacity_bytes", 64 << 20))
    except Exception:  # pragma: no cover - defensive fallback off-TPU / older jax
        cap = 64 << 20
    return int(min(int(0.75 * cap), max(32 << 20, 2 * per_step_bytes)))


def resize_max_size(img: jax.Array, max_size: int, fill: float = 0.0,
                    compute_dtype=jnp.bfloat16) -> jax.Array:
    """Equivalent of ResizeMaxSize.forward for a CHW float image."""
    C, H, W = img.shape
    scale = max_size / float(max(H, W))
    if scale == 1.0:
        # Matches the module's quirk: unresized, possibly non-square, unpadded.
        return img

    S = max_size
    new_h = int(round(H * scale))
    new_w = int(round(W * scale))
    pad_top = (S - new_h) // 2
    pad_left = (S - new_w) // 2

    # Interpolation matrices built in f32, padding folded in as zero rows/cols,
    # cast once to the MXU compute dtype (tiny arrays, negligible traffic).
    wh = _bicubic_weight_matrix(H, new_h)                                # (new_h, H) f32
    ww = _bicubic_weight_matrix(W, new_w)                                # (new_w, W) f32
    whp = (jnp.zeros((S, H), jnp.float32)
           .at[pad_top:pad_top + new_h, :].set(wh)).astype(compute_dtype)        # (S, H)
    wwtp = (jnp.zeros((W, S), jnp.float32)
            .at[:, pad_left:pad_left + new_w].set(ww.T)).astype(compute_dtype)   # (W, S)

    add_fill = float(fill) != 0.0
    h_first = H >= W  # contract the larger spatial dim first

    kernel = functools.partial(
        _resize_pad_kernel, h_first=h_first, compute_dtype=compute_dtype,
        add_fill=add_fill, fill=float(fill), pad_top=pad_top, pad_left=pad_left,
        new_h=new_h, new_w=new_w, S=S)

    itemsize = img.dtype.itemsize
    cds = jnp.dtype(compute_dtype).itemsize
    per_step = (2 * H * W * itemsize                 # double-buffered image block
                + H * W * cds                        # in-kernel cast copy
                + 2 * (S * H + W * S) * cds          # weight matrices (buffered)
                + max(H, W) * S * (4 + cds)          # stage-A slab (f32 + cast copy)
                + S * S * 4                          # f32 result canvas
                + 2 * S * S * itemsize)              # double-buffered output block

    out = pl.pallas_call(
        kernel,
        out_shape=jax.ShapeDtypeStruct((C, S, S), img.dtype),
        grid=(C,),
        in_specs=[
            pl.BlockSpec((1, H, W), lambda c: (c, 0, 0)),   # one channel per step
            pl.BlockSpec((S, H), lambda c: (0, 0)),         # weights stay resident
            pl.BlockSpec((W, S), lambda c: (0, 0)),
        ],
        out_specs=pl.BlockSpec((1, S, S), lambda c: (c, 0, 0)),
        compiler_params=pltpu.CompilerParams(
            dimension_semantics=("parallel",),               # v7x: split channels on 2 TCs
            vmem_limit_bytes=_vmem_limit_bytes(per_step)),
    )(img, whp, wwtp)
    return out


def _reference(img, max_size, fill=0.0):
    """Pure-JAX f32 reference (same math, no Pallas)."""
    C, H, W = img.shape
    scale = max_size / float(max(H, W))
    if scale == 1.0:
        return img
    new_h, new_w = int(round(H * scale)), int(round(W * scale))
    wh = _bicubic_weight_matrix(H, new_h)
    ww = _bicubic_weight_matrix(W, new_w)
    res = jnp.einsum("oh,chw,pw->cop", wh, img.astype(jnp.float32), ww)
    pad_h, pad_w = max_size - new_h, max_size - new_w
    return jnp.pad(
        res,
        ((0, 0), (pad_h // 2, pad_h - pad_h // 2), (pad_w // 2, pad_w - pad_w // 2)),
        constant_values=float(fill),
    ).astype(img.dtype)


if __name__ == "__main__":
    k0, k1 = jax.random.split(jax.random.PRNGKey(0))
    max_size = 8

    # Portrait image (H > W): contract-H-first path, fill == 0 (no mask).
    # 4 channels, 16 x 12 -> scale 0.5 -> resized (8, 6), 1-col pad each side.
    img_p = jax.random.uniform(k0, (4, 16, 12), dtype=jnp.float32)
    out_p = jax.block_until_ready(resize_max_size(img_p, max_size, fill=0.0))
    ref_p = _reference(img_p, max_size, fill=0.0)
    assert out_p.shape == (4, max_size, max_size)
    assert jnp.allclose(out_p, ref_p, atol=3e-2, rtol=3e-2), \
        float(jnp.max(jnp.abs(out_p - ref_p)))

    # Landscape image (W > H) with fill != 0: contract-W-first path + fill mask.
    img_l = jax.random.uniform(k1, (3, 12, 16), dtype=jnp.float32)
    out_l = jax.block_until_ready(resize_max_size(img_l, max_size, fill=2.0))
    ref_l = _reference(img_l, max_size, fill=2.0)
    assert out_l.shape == (3, max_size, max_size)
    assert jnp.allclose(out_l, ref_l, atol=3e-2, rtol=3e-2), \
        float(jnp.max(jnp.abs(out_l - ref_l)))

    print("KERNEL_OK")
</pallas_src>

<mosaic_0001>
module attributes {stable_mosaic.version = 11 : i64} {
  func.func @_resize_pad_kernel(%arg0: i32, %arg1: memref<1x16x12xf32, #tpu.memory_space<vmem>>, %arg2: memref<8x16xbf16, #tpu.memory_space<vmem>>, %arg3: memref<12x8xbf16, #tpu.memory_space<vmem>>, %arg4: memref<1x8x8xf32, #tpu.memory_space<vmem>>) attributes {dimension_semantics = [#tpu.dimension_semantics<parallel>], iteration_bounds = array<i64: 4>, scalar_prefetch = 0 : i64, scratch_operands = 0 : i64, tpu.core_type = #tpu.core_type<tc>, window_params = [{transform_indices = @transform_0, window_bounds = array<i64: 1, 16, 12>}, {pipeline_mode = #tpu.pipeline_mode<synchronous>, transform_indices = @transform_1, window_bounds = array<i64: 8, 16>}, {pipeline_mode = #tpu.pipeline_mode<synchronous>, transform_indices = @transform_2, window_bounds = array<i64: 12, 8>}, {transform_indices = @transform_3, window_bounds = array<i64: 1, 8, 8>}]} {
    %c0 = arith.constant 0 : index
    %c0_0 = arith.constant 0 : index
    %c0_1 = arith.constant 0 : index
    %0 = vector.load %arg1[%c0, %c0_0, %c0_1] : memref<1x16x12xf32, #tpu.memory_space<vmem>>, vector<1x16x12xf32>
    %1 = vector.shape_cast %0 : vector<1x16x12xf32> to vector<16x12xf32>
    %2 = arith.truncf %1 : vector<16x12xf32> to vector<16x12xbf16>
    %c0_2 = arith.constant 0 : index
    %c0_3 = arith.constant 0 : index
    %3 = vector.load %arg2[%c0_2, %c0_3] : memref<8x16xbf16, #tpu.memory_space<vmem>>, vector<8x16xbf16>
    %c0_4 = arith.constant 0 : index
    %c0_5 = arith.constant 0 : index
    %4 = vector.load %arg3[%c0_4, %c0_5] : memref<12x8xbf16, #tpu.memory_space<vmem>>, vector<12x8xbf16>
    %cst = arith.constant dense<0.000000e+00> : vector<8x12xf32>
    %5 = tpu.matmul %3, %2, %cst {dimension_numbers = #tpu.dot_dimension_numbers<[1], [0], [0], [1], [0, 0, 1, 1], [], []>} : vector<8x16xbf16>, vector<16x12xbf16>, vector<8x12xf32> -> vector<8x12xf32>
    %6 = arith.truncf %5 : vector<8x12xf32> to vector<8x12xbf16>
    %cst_6 = arith.constant dense<0.000000e+00> : vector<8x8xf32>
    %7 = tpu.matmul %6, %4, %cst_6 {dimension_numbers = #tpu.dot_dimension_numbers<[1], [0], [0], [1], [0, 0, 1, 1], [], []>} : vector<8x12xbf16>, vector<12x8xbf16>, vector<8x8xf32> -> vector<8x8xf32>
    %c0_7 = arith.constant 0 : index
    %c0_8 = arith.constant 0 : index
    %c0_9 = arith.constant 0 : index
    %8 = vector.load %arg4[%c0_7, %c0_8, %c0_9] : memref<1x8x8xf32, #tpu.memory_space<vmem>>, vector<1x8x8xf32>
    %9 = vector.shape_cast %8 : vector<1x8x8xf32> to vector<8x8xf32>
    %10 = vector.shape_cast %7 : vector<8x8xf32> to vector<1x8x8xf32>
    tpu.vector_store %arg4[%c0_7, %c0_8, %c0_9], %10 {strides = array<i32>} : memref<1x8x8xf32, #tpu.memory_space<vmem>>, vector<1x8x8xf32>,
    return
  }
  func.func @transform_0(%arg0: i32) -> (i32, i32, i32) {
    %c0_i32 = arith.constant 0 : i32
    %c0_i32_0 = arith.constant 0 : i32
    %c0_i32_1 = arith.constant 0 : i32
    return %arg0, %c0_i32, %c0_i32_0 : i32, i32, i32
  }
  func.func @transform_1(%arg0: i32) -> (i32, i32) {
    %c0_i32 = arith.constant 0 : i32
    %c0_i32_0 = arith.constant 0 : i32
    %c0_i32_1 = arith.constant 0 : i32
    return %c0_i32, %c0_i32_0 : i32, i32
  }
  func.func @transform_2(%arg0: i32) -> (i32, i32) {
    %c0_i32 = arith.constant 0 : i32
    %c0_i32_0 = arith.constant 0 : i32
    %c0_i32_1 = arith.constant 0 : i32
    return %c0_i32, %c0_i32_0 : i32, i32
  }
  func.func @transform_3(%arg0: i32) -> (i32, i32, i32) {
    %c0_i32 = arith.constant 0 : i32
    %c0_i32_0 = arith.constant 0 : i32
    %c0_i32_1 = arith.constant 0 : i32
    return %arg0, %c0_i32, %c0_i32_0 : i32, i32, i32
  }
}

</mosaic_0001>

<llo_original>
// kernel: tpu_custom_call.1
$region0: #{tpu_custom_call.1}
  #allocation0 [shape = 'u32[]', space=smem, size = 0x4, offset = 0x4, fixed_abs, tag = 'smem constant byte address 0x4 - core index']
  #allocation1 [shape = 'u32[72,128]{1,0:T(1,128)}', space=vmem, size = 0x9000, scoped, tag = 'internal scratch']
  %s0 = inlined_call_operand.vmem [shape: f32[4,16,12], index: 0, kind: input, shape index: {}]
  %s1 = inlined_call_operand.vmem [shape: bf16[8,16], index: 1, kind: input, shape index: {}]
  %s2 = inlined_call_operand.vmem [shape: bf16[12,8], index: 2, kind: input, shape index: {}]
  %s3 = inlined_call_operand.hbm [shape: f32[4,8,8], index: 3, kind: output, shape index: {}]
  %s4 = sld [smem:[#allocation0]]
  $region45: #{tpu_custom_call.1} parent=0
    _
  %s6 = ssub.s32 1, %s4
  %s7 = scalar_select 0, %s6, %s4
  $region1: #{tpu_custom_call.1} parent=0
    #allocation2 [shape = 'u8[8192]{0}', space=vmem, size = 0x2000, scoped, tag = 'output window, operand 0']
    #allocation3 [shape = 's32[2]{0}', space=sflag, size = 0x8, scoped, tag = 'scoped memory for tpu_custom_call.1']
    %8 = vsyncpa [#allocation3], 0
    %s9 = scalar_lea.sflag [#allocation3], 1
    %10 = vsyncpa %s9, 0
    loop: start=0, step=1, limit=6
    $region2: #{tpu_custom_call.1} parent=1 // loop_pre_header
      _
    $region3: #{tpu_custom_call.1} parent=1 // loop_header
      %s12 = sphi 0, %s16
      %p13 = scmp.ge.s32.totalorder %s12, 6
      %s22 = sphi 0, %s24
      %s25 = sphi 0, %s22
      %s26 = sphi 0, %s25
      %s42 = sphi 0, %s26
      %s46 = sphi 0, %s46
      %s48 = sphi 0, %s46
      %s49 = sphi 0, %s48
      %s63 = sphi 0, %s49
      %s67 = sphi 0, %s67
      %s69 = sphi 0, %s67
      %s70 = sphi 0, %s69
      %s84 = sphi 0, %s70
      %s90 = sphi 0, %s92
      %s93 = sphi 0, %s90
      %s94 = sphi 0, %s93
      %s110 = sphi 0, %s94
    $region4: #{tpu_custom_call.1} parent=1 // loop_header_branch
      %15 = sbr.rel (%p13) target = $region8
    $region5: #{tpu_custom_call.1} parent=1 // loop_body
      %s17 = ssub.s32 %s12, 1
      %s18 = ssub.s32 %s12, 2
      %s19 = sadd.s32 %s12, 1
      %s20 = ssub.s32 %s12, %s19
      %p21 = scmp.eq.s32.totalorder %s20, 0
      %s23 = sadd.s32 %s22, 1
      %s24 = scalar_select %p21, %s22, %s23
      %p27 = pneg %p21
      %p28 = scmp.eq.s32.totalorder %s12, 3
      %p29 = por %p27, %p28
      %p30 = scmp.ne.s32.totalorder %s22, %s25
      %p31 = scmp.eq.s32.totalorder %s12, 0
      %p32 = por %p30, %p31
      %p33 = scmp.ne.s32.totalorder %s22, %s25
      %p34 = scmp.eq.s32.totalorder %s17, 3
      %p35 = por %p33, %p34
      %p36 = scmp.ne.s32.totalorder %s25, %s26
      %p37 = scmp.eq.s32.totalorder %s17, 0
      %p38 = por %p36, %p37
      %p39 = scmp.ne.s32.totalorder %s25, %s26
      %p40 = scmp.eq.s32.totalorder %s18, 3
      %p41 = por %p39, %p40
      %p43 = scmp.ne.s32.totalorder %s26, %s42
      %p44 = scmp.eq.s32.totalorder %s18, 0
      %p45 = por %p43, %p44
      %s47 = sadd.s32 %s46, 1
      %p50 = scmp.eq.s32.totalorder %s12, 3
      %p51 = scmp.ne.s32.totalorder %s46, %s48
      %p52 = scmp.eq.s32.totalorder %s12, 0
      %p53 = por %p51, %p52
      %p54 = scmp.ne.s32.totalorder %s46, %s48
      %p55 = scmp.eq.s32.totalorder %s17, 3
      %p56 = por %p54, %p55
      %p57 = scmp.ne.s32.totalorder %s48, %s49
      %p58 = scmp.eq.s32.totalorder %s17, 0
      %p59 = por %p57, %p58
      %p60 = scmp.ne.s32.totalorder %s48, %s49
      %p61 = scmp.eq.s32.totalorder %s18, 3
      %p62 = por %p60, %p61
      %p64 = scmp.ne.s32.totalorder %s49, %s63
      %p65 = scmp.eq.s32.totalorder %s18, 0
      %p66 = por %p64, %p65
      %s68 = sadd.s32 %s67, 1
      %p71 = scmp.eq.s32.totalorder %s12, 3
      %p72 = scmp.ne.s32.totalorder %s67, %s69
      %p73 = scmp.eq.s32.totalorder %s12, 0
      %p74 = por %p72, %p73
      %p75 = scmp.ne.s32.totalorder %s67, %s69
      %p76 = scmp.eq.s32.totalorder %s17, 3
      %p77 = por %p75, %p76
      %p78 = scmp.ne.s32.totalorder %s69, %s70
      %p79 = scmp.eq.s32.totalorder %s17, 0
      %p80 = por %p78, %p79
      %p81 = scmp.ne.s32.totalorder %s69, %s70
      %p82 = scmp.eq.s32.totalorder %s18, 3
      %p83 = por %p81, %p82
      %p85 = scmp.ne.s32.totalorder %s70, %s84
      %p86 = scmp.eq.s32.totalorder %s18, 0
      %p87 = por %p85, %p86
      %s88 = ssub.s32 %s12, %s19
      %p89 = scmp.eq.s32.totalorder %s88, 0
      %s91 = sadd.s32 %s90, 1
      %s92 = scalar_select %p89, %s90, %s91
      %p95 = pneg %p89
      %p96 = scmp.eq.s32.totalorder %s12, 3
      %p97 = por %p95, %p96
      %p98 = scmp.ne.s32.totalorder %s90, %s93
      %p99 = scmp.eq.s32.totalorder %s12, 0
      %p100 = por %p98, %p99
      %p101 = scmp.ne.s32.totalorder %s90, %s93
      %p102 = scmp.eq.s32.totalorder %s17, 3
      %p103 = por %p101, %p102
      %p104 = scmp.ne.s32.totalorder %s93, %s94
      %p105 = scmp.eq.s32.totalorder %s17, 0
      %p106 = por %p104, %p105
      %p107 = scmp.ne.s32.totalorder %s93, %s94
      %p108 = scmp.eq.s32.totalorder %s18, 3
      %p109 = por %p107, %p108
      %p111 = scmp.ne.s32.totalorder %s94, %s110
      %p112 = scmp.eq.s32.totalorder %s18, 0
      %p113 = por %p111, %p112
      %p114 = scmp.le.s32.totalorder 1, %s12
      %p115 = scmp.lt.s32.totalorder %s12, 5
      %p116 = pnand %p114, %p115
      %p117 = pneg %p116
      // Predicated region
      $region9: #{tpu_custom_call.1} parent=5 // pred_check
        _
      $region10: #{tpu_custom_call.1} parent=5 // pred_check_branch
        %119 = sbr.rel (%p116) target = $region12
      $region11: #{tpu_custom_call.1} parent=5 // pred_region
        %s120 = ssub.s32 %s12, 1
        // Predicated region
        $region13: #{tpu_custom_call.1} parent=11 // pred_check
          %p121 = pneg %p59
        $region14: #{tpu_custom_call.1} parent=11 // pred_check_branch
          %123 = sbr.rel (%p121) target = $region16
        $region15: #{tpu_custom_call.1} parent=11 // pred_region
          _
        $region16: #{tpu_custom_call.1} parent=11 // pred_fallthru
          _
        // Predicated region
        $region17: #{tpu_custom_call.1} parent=11 // pred_check
          %p124 = pneg %p80
        $region18: #{tpu_custom_call.1} parent=11 // pred_check_branch
          %126 = sbr.rel (%p124) target = $region20
        $region19: #{tpu_custom_call.1} parent=11 // pred_region
          _
        $region20: #{tpu_custom_call.1} parent=11 // pred_fallthru
          _
      $region12: #{tpu_custom_call.1} parent=5 // pred_fallthru
        _
      %p127 = scmp.lt.s32.totalorder %s12, 4
      // Predicated region
      $region21: #{tpu_custom_call.1} parent=5 // pred_check
        %p128 = pneg %p127
      $region22: #{tpu_custom_call.1} parent=5 // pred_check_branch
        %130 = sbr.rel (%p128) target = $region24
      $region23: #{tpu_custom_call.1} parent=5 // pred_region
        // Predicated region
        $region25: #{tpu_custom_call.1} parent=23 // pred_check
          %p131 = pneg %p32
        $region26: #{tpu_custom_call.1} parent=23 // pred_check_branch
          %133 = sbr.rel (%p131) target = $region28
        $region27: #{tpu_custom_call.1} parent=23 // pred_region
          %p134 = scmp.lt.s32.totalorder %s12, 3
          %s135 = scalar_select %p134, %s12, 3
          %s136 = smul.addr %s135, 2
          %s137 = smul.addr %s136, 8
          %s138 = scalar_lea.vmem %s0, %s137
        $region28: #{tpu_custom_call.1} parent=23 // pred_fallthru
          _
      $region24: #{tpu_custom_call.1} parent=5 // pred_fallthru
        _
      %p139 = scmp.le.s32.totalorder 1, %s12
      %p140 = scmp.lt.s32.totalorder %s12, 5
      %p141 = pnand %p139, %p140
      %p142 = pneg %p141
      // Predicated region
      $region29: #{tpu_custom_call.1} parent=5 // pred_check
        _
      $region30: #{tpu_custom_call.1} parent=5 // pred_check_branch
        %144 = sbr.rel (%p141) target = $region32
      $region31: #{tpu_custom_call.1} parent=5 // pred_region
        %s145 = ssub.s32 %s12, 1
        %p146 = scmp.lt.s32.totalorder %s17, 3
        %s147 = scalar_select %p146, %s17, 3
        %s148 = smul.addr %s147, 2
        %s149 = smul.addr %s148, 8
        %s150 = scalar_lea.vmem %s0, %s149
        %p151 = pneg %p38
        %p152 = pneg %p35
        %p153 = pneg %p59
        %p154 = pneg %p56
        %p155 = pneg %p80
        %p156 = pneg %p77
        %p157 = pneg %p106
        %p158 = pneg %p103
        %s159 = sand.u32 %s93, 1
        %s160 = scalar_lea.sflag [#allocation3], %s159
        %s161 = sand.u32 %s93, 1
        %s162 = smul.addr %s161, 8
        %s163 = scalar_lea.vmem [#allocation2], %s162
        %p164 = scmp.lt.s32.totalorder %s17, 3
        %s165 = scalar_select %p164, %s17, 3
        %s166 = smul.addr %s165, 2
        %s167 = smul.addr %s166, 8
        %s168 = scalar_lea.vmem %s0, %s167
        %v170 = vld [vmem:[%s168] sm:$0xff]
        %v171 = vld [vmem:[%s168 + $0x8] sm:$0xff]
        %v172 = vpack.c.bf16 %v171, %v170
        %v173 = vld [vmem:[%s1] sm:$0xf]
        %v174 = vld [vmem:[%s2] sm:$0xf]
        %v175 = vld [vmem:[%s2 + $0x4] sm:$0x3]
        %vm176 = vcmask 130048
        %v178 = vsel %vm176, %v173, 0
        %180 = vmatpush.bf16.msra.mxu0 0
        %181 = vmatpush.bf16.msra.mxu0 0
        %182 = vmatpush.bf16.msra.mxu0 0
        %183 = vmatpush.bf16.msra.mxu0 0
        %184 = vmatpush.bf16.msra.mxu0 0
        %185 = vmatpush.bf16.msra.mxu0 0
        %186 = vmatpush.bf16.msra.mxu0 0
        %187 = vmatpush.bf16.msra.mxu0 %v172
        %188 = vmatmul.bf16.gmra.mxu0 %v178
        %v189 = vpop.f32.mrf.mxu0
        %v190 = vadd.f32 0.0, %v189
        %v191 = vpop.f32.mrf.mxu0
        %192 = vdwg.mxu0
        %v193 = vpack.c.bf16 %v190, %v190
        %v196 = vunpack.c.l.b16 %v174
        %v197 = vunpack.c.l.b16 %v175
        %v198 = vpack.c.b16 %v197, %v196
        %vm199 = vcmask 97280
        %v201 = vsel %vm199, %v193, 0
        %vm203 = vcmask 1045504
        %v205 = vsel %vm203, %v198, 0
        %207 = vmatpush.bf16.msra.mxu0 0
        %208 = vmatpush.bf16.msra.mxu0 0
        %209 = vmatpush.bf16.msra.mxu0 0
        %210 = vmatpush.bf16.msra.mxu0 0
        %211 = vmatpush.bf16.msra.mxu0 0
        %212 = vmatpush.bf16.msra.mxu0 0
        %213 = vmatpush.bf16.msra.mxu0 0
        %214 = vmatpush.bf16.msra.mxu0 %v205
        %215 = vmatmul.bf16.gmra.mxu0 %v201
        %v216 = vpop.f32.mrf.mxu0
        %v217 = vadd.f32 0.0, %v216
        %v218 = vpop.f32.mrf.mxu0
        %219 = vdwg.mxu0
        %vm220 = vcmask 64512
        %221 = vst.msk [vmem:[%s163] sm:$0xff] %vm220, %v217
        %s222 = sand.u32 %s93, 1
        %s223 = scalar_lea.sflag [#allocation3], %s222
        %s224 = sand.u32 %s93, 1
        %s225 = smul.addr %s224, 8
        %s226 = scalar_lea.vmem [#allocation2], %s225
        // Predicated region
        $region33: #{tpu_custom_call.1} parent=31 // pred_check
          %p227 = pneg %p103
        $region34: #{tpu_custom_call.1} parent=31 // pred_check_branch
          %229 = sbr.rel (%p227) target = $region36
        $region35: #{tpu_custom_call.1} parent=31 // pred_region
          %231 = vsyncadd %s223, 0
          %s232 = smul.addr %s17, 8
          %s233 = scalar_lea.hbm %s3, %s232
          %s235 = sshll.u32 %s226, 4
          %s236 = int_to_ptr.vmem [resolvable:$true] %s235
          %s237 = sshll.u32 %s233, 4
          %s238 = int_to_ptr.hbm [resolvable:$true] %s237
          %240 = dma.vmem_to_hbm [thread:$0]  %s236, 128, %s238, %s223
        $region36: #{tpu_custom_call.1} parent=31 // pred_fallthru
          _
      $region32: #{tpu_custom_call.1} parent=5 // pred_fallthru
        _
      %p241 = scmp.le.s32.totalorder 2, %s12
      // Predicated region
      $region37: #{tpu_custom_call.1} parent=5 // pred_check
        %p242 = pneg %p241
      $region38: #{tpu_custom_call.1} parent=5 // pred_check_branch
        %244 = sbr.rel (%p242) target = $region40
      $region39: #{tpu_custom_call.1} parent=5 // pred_region
        %s245 = ssub.s32 %s12, 2
        // Predicated region
        $region41: #{tpu_custom_call.1} parent=39 // pred_check
          %p246 = pneg %p109
        $region42: #{tpu_custom_call.1} parent=39 // pred_check_branch
          %248 = sbr.rel (%p246) target = $region44
        $region43: #{tpu_custom_call.1} parent=39 // pred_region
          %s249 = sand.u32 %s94, 1
          %s250 = scalar_lea.sflag [#allocation3], %s249
          %s251 = sand.u32 %s94, 1
          %s252 = smul.addr %s251, 8
          %s253 = scalar_lea.vmem [#allocation2], %s252
          %255 = dma.done %s250, 128
        $region44: #{tpu_custom_call.1} parent=39 // pred_fallthru
          _
      $region40: #{tpu_custom_call.1} parent=5 // pred_fallthru
        _
    $region6: #{tpu_custom_call.1} parent=1 // loop_footer
      %s16 = sadd.s32 1, %s12
    $region7: #{tpu_custom_call.1} parent=1 // loop_footer_branch
      %11 = sbr.rel target = $region3
    $region8: #{tpu_custom_call.1} parent=1 // loop_exit
      _
    %256 = vsyncpa [#allocation3], 1
    %s257 = scalar_lea.sflag [#allocation3], 1
    %258 = vsyncpa %s257, 1

</llo_original>
